<compile_context>
chip_gen: v5e
topology: v5e:2x2
jax: 0.10.0
libtpu: 0.0.40
codegen_flags: <defaults>
</compile_context>

<pallas_src>
import functools
import math

import jax
import jax.numpy as jnp
import numpy as np
from jax import lax
from jax.experimental import pallas as pl
from jax.experimental.pallas import tpu as pltpu


def _attention_kernel(x_ref, wq_ref, wk_ref, wv_ref, wp_ref, b_ref, o_ref,
                      k_scr, v_scr, ctx_scr, *, tq, n_heads, head_dim, approx_recip):
    # x_ref:   (N, C)   current batch element (compute dtype; fetched once per b)
    # wq_ref:  (C, C)   q weights (in, out) layout, softmax scale pre-folded (resident)
    # wk_ref:  (C, C)   k weights (resident)
    # wv_ref:  (C, C)   v weights (resident)
    # wp_ref:  (C, C)   output-projection weights, (in, out) layout (resident)
    # b_ref:   (1, C)   proj bias (f32, resident)
    # o_ref:   (tq, C)  output block for this (batch, query-tile)
    # k_scr/v_scr: (N, C) compute-dtype scratch, K/V cache for the current batch element
    # ctx_scr: (tq, C)  compute-dtype scratch assembling all heads' contexts
    qi = pl.program_id(1)
    n = x_ref.shape[0]
    cdt = x_ref.dtype

    # K/V for the whole sequence: computed once per batch element (qi == 0), then reused
    # across all query tiles of that batch element (qi axis is "arbitrary", so within a
    # core every batch element starts at qi == 0).
    @pl.when(qi == 0)
    def _compute_kv():
        xs = x_ref[...]
        k_scr[...] = jnp.dot(xs, wk_ref[...],
                             preferred_element_type=jnp.float32).astype(cdt)
        v_scr[...] = jnp.dot(xs, wv_ref[...],
                             preferred_element_type=jnp.float32).astype(cdt)

    # Query rows for this tile (static fast-path when the tile covers the whole sequence).
    if tq == n:
        x_q = x_ref[...]
    else:
        start = pl.multiple_of(qi * tq, tq)
        x_q = x_ref[pl.ds(start, tq), :]

    # Full-width Q projection (scale already folded into wq): (tq, C) @ (C, C).
    q = jnp.dot(x_q, wq_ref[...], preferred_element_type=jnp.float32).astype(cdt)

    # Per-head attention (short unrolled loop; only one (tq, N) f32 score tensor live).
    for h in range(n_heads):
        lo = h * head_dim
        hi = lo + head_dim
        qh = q[:, lo:hi]                                     # (tq, Dh)
        kh = k_scr[:, lo:hi]                                 # (N, Dh)
        vh = v_scr[:, lo:hi]                                 # (N, Dh)

        # Scores: contract over Dh on both operands -> no materialized k.T.
        s = lax.dot_general(qh, kh, dimension_numbers=(((1,), (1,)), ((), ())),
                            preferred_element_type=jnp.float32)      # (tq, N) f32
        s = s - jnp.max(s, axis=-1, keepdims=True)
        e = jnp.exp(s)
        denom = jnp.sum(e, axis=-1, keepdims=True)                    # (tq, 1) f32

        # PV first, normalize after (O(tq*Dh) multiplies instead of O(tq*N)).
        ctx = jnp.dot(e.astype(cdt), vh, preferred_element_type=jnp.float32)  # (tq, Dh)
        ctx = ctx * pl.reciprocal(denom, approx=approx_recip)
        ctx_scr[:, lo:hi] = ctx.astype(cdt)

    # Output projection with a C-deep contraction + bias, one lane-dense (tq, C) store.
    out = jnp.dot(ctx_scr[...], wp_ref[...],
                  preferred_element_type=jnp.float32) + b_ref[...]
    o_ref[...] = out.astype(o_ref.dtype)


def _choose_q_tile(n, max_tile):
    """Largest divisor of n that is <= max_tile and a multiple of 8 (else n)."""
    if n <= max_tile:
        return n
    for t in range(max_tile, 7, -1):
        if n % t == 0 and t % 8 == 0:
            return t
    return n


def _pick_vmem_limit():
    """Generation-aware VMEM limit: ~7/8 of physical, capped at 112 MiB."""
    phys = 64 * 1024 * 1024  # conservative default (v7x per-core VMEM)
    try:
        info = pltpu.get_tpu_info()
        cap = getattr(info, "vmem_capacity_bytes", None)
        if cap:
            phys = int(cap)
    except Exception:
        pass
    return int(min(phys * 7 // 8, 112 * 1024 * 1024))


def attention_pallas(x, w_qkv, w_proj, b_proj, num_heads, *,
                     compute_dtype=jnp.bfloat16, max_q_tile=512):
    """x: (B, N, C). w_qkv: (3C, C) PyTorch nn.Linear layout. w_proj: (C, C). b_proj: (C,)."""
    B, N, C = x.shape
    H = num_heads
    assert C % H == 0, "dim should be divisible by num_heads"
    Dh = C // H
    scale = Dh ** (-0.5)

    # ---- host-side weight re-layout (free; matches PyTorch head ordering) ----
    # qkv = x @ w_qkv.T ; q/k/v use rows [0:C], [C:2C], [2C:3C] of w_qkv respectively,
    # and head h occupies contiguous columns [h*Dh:(h+1)*Dh] of each projection output.
    wq = (w_qkv[0:C].T * scale)        # (C, C), softmax scale folded into q weights
    wk = w_qkv[C:2 * C].T              # (C, C)
    wv = w_qkv[2 * C:3 * C].T          # (C, C)
    wp = w_proj.T                      # (C, C)  (out = ctx @ w_proj.T)
    bias = b_proj.reshape(1, C).astype(jnp.float32)

    xc = x.astype(compute_dtype)
    wq = wq.astype(compute_dtype)
    wk = wk.astype(compute_dtype)
    wv = wv.astype(compute_dtype)
    wp = wp.astype(compute_dtype)

    tq = _choose_q_tile(N, max_q_tile)
    n_q_tiles = N // tq

    kernel = functools.partial(
        _attention_kernel,
        tq=tq, n_heads=H, head_dim=Dh,
        approx_recip=(compute_dtype != jnp.float32))

    return pl.pallas_call(
        kernel,
        out_shape=jax.ShapeDtypeStruct((B, N, C), x.dtype),
        grid_spec=pltpu.PrefetchScalarGridSpec(
            num_scalar_prefetch=0,
            grid=(B, n_q_tiles),
            in_specs=[
                # x: constant across the query-tile axis -> one DMA per batch element.
                pl.BlockSpec((None, N, C), lambda b, qi: (b, 0, 0)),
                # Weights / bias: constant index maps -> DMA'd once, VMEM-resident.
                pl.BlockSpec((C, C), lambda b, qi: (0, 0)),   # wq (pre-scaled)
                pl.BlockSpec((C, C), lambda b, qi: (0, 0)),   # wk
                pl.BlockSpec((C, C), lambda b, qi: (0, 0)),   # wv
                pl.BlockSpec((C, C), lambda b, qi: (0, 0)),   # w_proj^T
                pl.BlockSpec((1, C), lambda b, qi: (0, 0)),   # bias
            ],
            out_specs=pl.BlockSpec((None, tq, C), lambda b, qi: (b, qi, 0)),
            scratch_shapes=[
                pltpu.VMEM((N, C), compute_dtype),   # K cache (per batch element)
                pltpu.VMEM((N, C), compute_dtype),   # V cache (per batch element)
                pltpu.VMEM((tq, C), compute_dtype),  # assembled per-tile context
            ],
        ),
        compiler_params=pltpu.CompilerParams(
            dimension_semantics=("parallel", "arbitrary"),
            vmem_limit_bytes=_pick_vmem_limit(),
        ),
    )(xc, wq, wk, wv, wp, bias)


def attention_reference(x, w_qkv, w_proj, b_proj, num_heads):
    """Pure-JAX f32 reference mirroring the PyTorch forward exactly."""
    B, N, C = x.shape
    head_dim = C // num_heads
    scale = head_dim ** (-0.5)
    qkv = x @ w_qkv.T                                   # (B, N, 3C)
    qkv = qkv.reshape(B, N, 3, num_heads, head_dim).transpose(2, 0, 3, 1, 4)
    q, k, v = qkv[0], qkv[1], qkv[2]                    # (B, H, N, Dh)
    attn = (q @ jnp.swapaxes(k, -2, -1)) * scale
    attn = jax.nn.softmax(attn, axis=-1)
    out = (attn @ v).transpose(0, 2, 1, 3).reshape(B, N, C)
    return out @ w_proj.T + b_proj


def _make_inputs(key, B, N, C):
    k_x, k_wqkv, k_wproj, k_bproj = jax.random.split(key, 4)
    x = jax.random.normal(k_x, (B, N, C), dtype=jnp.float32)
    # nn.Linear layouts: (out_features, in_features)
    w_qkv = jax.random.normal(k_wqkv, (3 * C, C), dtype=jnp.float32) * (1.0 / math.sqrt(C))
    w_proj = jax.random.normal(k_wproj, (C, C), dtype=jnp.float32) * (1.0 / math.sqrt(C))
    b_proj = jax.random.normal(k_bproj, (C,), dtype=jnp.float32) * 0.01
    return x, w_qkv, w_proj, b_proj


if __name__ == "__main__":
    key = jax.random.PRNGKey(0)
    k_small, k_med = jax.random.split(key, 2)

    # ---- small config (module-consistent shapes: B=2, seq=8, hidden=32, heads=4) ----
    B, N, C = 2, 8, 32
    num_heads = 4
    x, w_qkv, w_proj, b_proj = _make_inputs(k_small, B, N, C)
    ref = attention_reference(x, w_qkv, w_proj, b_proj, num_heads)

    # 1) f32 compute path: validates the algorithm / weight re-layout tightly.
    out_f32 = attention_pallas(x, w_qkv, w_proj, b_proj, num_heads,
                               compute_dtype=jnp.float32)
    out_f32 = jax.block_until_ready(out_f32)
    np.testing.assert_allclose(np.asarray(out_f32), np.asarray(ref), rtol=1e-4, atol=1e-4)

    # 2) bf16 MXU-operand path (default / performance configuration); loose tolerance
    #    reflects bf16 operand rounding (accumulation stays in f32).
    out_bf16 = attention_pallas(x, w_qkv, w_proj, b_proj, num_heads,
                                compute_dtype=jnp.bfloat16)
    out_bf16 = jax.block_until_ready(out_bf16)
    np.testing.assert_allclose(np.asarray(out_bf16), np.asarray(ref), rtol=1e-1, atol=1e-1)

    # ---- medium config exercising the query-tile axis + K/V cache reuse (QT = 2) ----
    B2, N2, C2, H2 = 2, 256, 128, 4
    x2, w_qkv2, w_proj2, b_proj2 = _make_inputs(k_med, B2, N2, C2)
    ref2 = attention_reference(x2, w_qkv2, w_proj2, b_proj2, H2)
    out2 = attention_pallas(x2, w_qkv2, w_proj2, b_proj2, H2,
                            compute_dtype=jnp.float32, max_q_tile=128)
    out2 = jax.block_until_ready(out2)
    np.testing.assert_allclose(np.asarray(out2), np.asarray(ref2), rtol=2e-4, atol=2e-4)

    print("KERNEL_OK")
</pallas_src>

<mosaic_0001>
module attributes {stable_mosaic.version = 11 : i64} {
  func.func @_attention_kernel(%arg0: i32, %arg1: i32, %arg2: memref<1x8x32xf32, #tpu.memory_space<vmem>>, %arg3: memref<32x32xf32, #tpu.memory_space<vmem>>, %arg4: memref<32x32xf32, #tpu.memory_space<vmem>>, %arg5: memref<32x32xf32, #tpu.memory_space<vmem>>, %arg6: memref<32x32xf32, #tpu.memory_space<vmem>>, %arg7: memref<1x32xf32, #tpu.memory_space<vmem>>, %arg8: memref<1x8x32xf32, #tpu.memory_space<vmem>>, %arg9: memref<8x32xf32, #tpu.memory_space<vmem>>, %arg10: memref<8x32xf32, #tpu.memory_space<vmem>>, %arg11: memref<8x32xf32, #tpu.memory_space<vmem>>) attributes {dimension_semantics = [#tpu.dimension_semantics<parallel>, #tpu.dimension_semantics<arbitrary>], iteration_bounds = array<i64: 2, 1>, scalar_prefetch = 0 : i64, scratch_operands = 3 : i64, tpu.core_type = #tpu.core_type<tc>, window_params = [{transform_indices = @transform_0, window_bounds = array<i64: 1, 8, 32>}, {pipeline_mode = #tpu.pipeline_mode<synchronous>, transform_indices = @transform_1, window_bounds = array<i64: 32, 32>}, {pipeline_mode = #tpu.pipeline_mode<synchronous>, transform_indices = @transform_2, window_bounds = array<i64: 32, 32>}, {pipeline_mode = #tpu.pipeline_mode<synchronous>, transform_indices = @transform_3, window_bounds = array<i64: 32, 32>}, {pipeline_mode = #tpu.pipeline_mode<synchronous>, transform_indices = @transform_4, window_bounds = array<i64: 32, 32>}, {pipeline_mode = #tpu.pipeline_mode<synchronous>, transform_indices = @transform_5, window_bounds = array<i64: 1, 32>}, {transform_indices = @transform_6, window_bounds = array<i64: 1, 8, 32>}]} {
    %c0_i32 = arith.constant 0 : i32
    %0 = arith.cmpi eq, %arg1, %c0_i32 : i32
    %1 = arith.extui %0 : i1 to i32
    %c0_i32_0 = arith.constant 0 : i32
    %2 = arith.cmpi ne, %1, %c0_i32_0 : i32
    scf.if %2 {
      %c0_52 = arith.constant 0 : index
      %c0_53 = arith.constant 0 : index
      %c0_54 = arith.constant 0 : index
      %80 = vector.load %arg2[%c0_52, %c0_53, %c0_54] : memref<1x8x32xf32, #tpu.memory_space<vmem>>, vector<1x8x32xf32>
      %81 = vector.shape_cast %80 : vector<1x8x32xf32> to vector<8x32xf32>
      %c0_55 = arith.constant 0 : index
      %c0_56 = arith.constant 0 : index
      %82 = vector.load %arg4[%c0_55, %c0_56] : memref<32x32xf32, #tpu.memory_space<vmem>>, vector<32x32xf32>
      %cst_57 = arith.constant dense<0.000000e+00> : vector<8x32xf32>
      %83 = tpu.matmul %81, %82, %cst_57 {dimension_numbers = #tpu.dot_dimension_numbers<[1], [0], [0], [1], [0, 0, 1, 1], [], []>} : vector<8x32xf32>, vector<32x32xf32>, vector<8x32xf32> -> vector<8x32xf32>
      %c0_58 = arith.constant 0 : index
      %c0_59 = arith.constant 0 : index
      %84 = vector.load %arg9[%c0_58, %c0_59] : memref<8x32xf32, #tpu.memory_space<vmem>>, vector<8x32xf32>
      tpu.vector_store %arg9[%c0_58, %c0_59], %83 {strides = array<i32>} : memref<8x32xf32, #tpu.memory_space<vmem>>, vector<8x32xf32>,
      %c0_60 = arith.constant 0 : index
      %c0_61 = arith.constant 0 : index
      %85 = vector.load %arg5[%c0_60, %c0_61] : memref<32x32xf32, #tpu.memory_space<vmem>>, vector<32x32xf32>
      %cst_62 = arith.constant dense<0.000000e+00> : vector<8x32xf32>
      %86 = tpu.matmul %81, %85, %cst_62 {dimension_numbers = #tpu.dot_dimension_numbers<[1], [0], [0], [1], [0, 0, 1, 1], [], []>} : vector<8x32xf32>, vector<32x32xf32>, vector<8x32xf32> -> vector<8x32xf32>
      %c0_63 = arith.constant 0 : index
      %c0_64 = arith.constant 0 : index
      %87 = vector.load %arg10[%c0_63, %c0_64] : memref<8x32xf32, #tpu.memory_space<vmem>>, vector<8x32xf32>
      tpu.vector_store %arg10[%c0_63, %c0_64], %86 {strides = array<i32>} : memref<8x32xf32, #tpu.memory_space<vmem>>, vector<8x32xf32>,
    } else {
    }
    %c0 = arith.constant 0 : index
    %c0_1 = arith.constant 0 : index
    %c0_2 = arith.constant 0 : index
    %3 = vector.load %arg2[%c0, %c0_1, %c0_2] : memref<1x8x32xf32, #tpu.memory_space<vmem>>, vector<1x8x32xf32>
    %4 = vector.shape_cast %3 : vector<1x8x32xf32> to vector<8x32xf32>
    %c0_3 = arith.constant 0 : index
    %c0_4 = arith.constant 0 : index
    %5 = vector.load %arg3[%c0_3, %c0_4] : memref<32x32xf32, #tpu.memory_space<vmem>>, vector<32x32xf32>
    %cst = arith.constant dense<0.000000e+00> : vector<8x32xf32>
    %6 = tpu.matmul %4, %5, %cst {dimension_numbers = #tpu.dot_dimension_numbers<[1], [0], [0], [1], [0, 0, 1, 1], [], []>} : vector<8x32xf32>, vector<32x32xf32>, vector<8x32xf32> -> vector<8x32xf32>
    %7 = vector.extract_strided_slice %6 {offsets = [0, 0], sizes = [8, 8], strides = [1, 1]} : vector<8x32xf32> to vector<8x8xf32>
    %c0_5 = arith.constant 0 : index
    %c0_6 = arith.constant 0 : index
    %8 = vector.load %arg9[%c0_5, %c0_6] : memref<8x32xf32, #tpu.memory_space<vmem>>, vector<8x8xf32>
    %c0_7 = arith.constant 0 : index
    %c0_8 = arith.constant 0 : index
    %9 = vector.load %arg10[%c0_7, %c0_8] : memref<8x32xf32, #tpu.memory_space<vmem>>, vector<8x8xf32>
    %cst_9 = arith.constant dense<0.000000e+00> : vector<8x8xf32>
    %10 = tpu.matmul %7, %8, %cst_9 {dimension_numbers = #tpu.dot_dimension_numbers<[1], [1], [0], [0], [0, 0, 1, 0], [], []>} : vector<8x8xf32>, vector<8x8xf32>, vector<8x8xf32> -> vector<8x8xf32>
    %cst_10 = arith.constant dense<0xFF800000> : vector<8xf32>
    %11 = vector.multi_reduction <maximumf>, %10, %cst_10 [1] : vector<8x8xf32> to vector<8xf32>
    %12 = vector.shape_cast %11 : vector<8xf32> to vector<8x1xf32>
    %13 = vector.broadcast %12 : vector<8x1xf32> to vector<8x8xf32>
    %14 = arith.subf %10, %13 : vector<8x8xf32>
    %15 = math.exp %14 : vector<8x8xf32>
    %cst_11 = arith.constant dense<0.000000e+00> : vector<8xf32>
    %16 = vector.multi_reduction <add>, %15, %cst_11 [1] : vector<8x8xf32> to vector<8xf32>
    %17 = vector.shape_cast %16 : vector<8xf32> to vector<8x1xf32>
    %cst_12 = arith.constant dense<0.000000e+00> : vector<8x8xf32>
    %18 = tpu.matmul %15, %9, %cst_12 {dimension_numbers = #tpu.dot_dimension_numbers<[1], [0], [0], [1], [0, 0, 1, 1], [], []>} : vector<8x8xf32>, vector<8x8xf32>, vector<8x8xf32> -> vector<8x8xf32>
    %19 = tpu.reciprocal %17 : vector<8x1xf32> -> vector<8x1xf32>
    %20 = vector.broadcast %19 : vector<8x1xf32> to vector<8x8xf32>
    %21 = arith.mulf %18, %20 : vector<8x8xf32>
    %c0_13 = arith.constant 0 : index
    %c0_14 = arith.constant 0 : index
    %22 = vector.load %arg11[%c0_13, %c0_14] : memref<8x32xf32, #tpu.memory_space<vmem>>, vector<8x8xf32>
    tpu.vector_store %arg11[%c0_13, %c0_14], %21 {strides = array<i32>} : memref<8x32xf32, #tpu.memory_space<vmem>>, vector<8x8xf32>,
    %23 = vector.extract_strided_slice %6 {offsets = [0, 8], sizes = [8, 8], strides = [1, 1]} : vector<8x32xf32> to vector<8x8xf32>
    %c0_15 = arith.constant 0 : index
    %c8 = arith.constant 8 : index
    %24 = vector.load %arg9[%c0_15, %c8] : memref<8x32xf32, #tpu.memory_space<vmem>>, vector<8x8xf32>
    %c0_16 = arith.constant 0 : index
    %c8_17 = arith.constant 8 : index
    %25 = vector.load %arg10[%c0_16, %c8_17] : memref<8x32xf32, #tpu.memory_space<vmem>>, vector<8x8xf32>
    %cst_18 = arith.constant dense<0.000000e+00> : vector<8x8xf32>
    %26 = tpu.matmul %23, %24, %cst_18 {dimension_numbers = #tpu.dot_dimension_numbers<[1], [1], [0], [0], [0, 0, 1, 0], [], []>} : vector<8x8xf32>, vector<8x8xf32>, vector<8x8xf32> -> vector<8x8xf32>
    %cst_19 = arith.constant dense<0xFF800000> : vector<8xf32>
    %27 = vector.multi_reduction <maximumf>, %26, %cst_19 [1] : vector<8x8xf32> to vector<8xf32>
    %28 = vector.shape_cast %27 : vector<8xf32> to vector<8x1xf32>
    %29 = vector.broadcast %28 : vector<8x1xf32> to vector<8x8xf32>
    %30 = arith.subf %26, %29 : vector<8x8xf32>
    %31 = math.exp %30 : vector<8x8xf32>
    %cst_20 = arith.constant dense<0.000000e+00> : vector<8xf32>
    %32 = vector.multi_reduction <add>, %31, %cst_20 [1] : vector<8x8xf32> to vector<8xf32>
    %33 = vector.shape_cast %32 : vector<8xf32> to vector<8x1xf32>
    %cst_21 = arith.constant dense<0.000000e+00> : vector<8x8xf32>
    %34 = tpu.matmul %31, %25, %cst_21 {dimension_numbers = #tpu.dot_dimension_numbers<[1], [0], [0], [1], [0, 0, 1, 1], [], []>} : vector<8x8xf32>, vector<8x8xf32>, vector<8x8xf32> -> vector<8x8xf32>
    %35 = tpu.reciprocal %33 : vector<8x1xf32> -> vector<8x1xf32>
    %36 = vector.broadcast %35 : vector<8x1xf32> to vector<8x8xf32>
    %37 = arith.mulf %34, %36 : vector<8x8xf32>
    %c0_22 = arith.constant 0 : index
    %c8_23 = arith.constant 8 : index
    %38 = vector.load %arg11[%c0_22, %c8_23] : memref<8x32xf32, #tpu.memory_space<vmem>>, vector<8x8xf32>
    tpu.vector_store %arg11[%c0_22, %c8_23], %37 {strides = array<i32>} : memref<8x32xf32, #tpu.memory_space<vmem>>, vector<8x8xf32>,
    %39 = vector.extract_strided_slice %6 {offsets = [0, 16], sizes = [8, 8], strides = [1, 1]} : vector<8x32xf32> to vector<8x8xf32>
    %c0_24 = arith.constant 0 : index
    %c16 = arith.constant 16 : index
    %40 = vector.load %arg9[%c0_24, %c16] : memref<8x32xf32, #tpu.memory_space<vmem>>, vector<8x8xf32>
    %c0_25 = arith.constant 0 : index
    %c16_26 = arith.constant 16 : index
    %41 = vector.load %arg10[%c0_25, %c16_26] : memref<8x32xf32, #tpu.memory_space<vmem>>, vector<8x8xf32>
    %cst_27 = arith.constant dense<0.000000e+00> : vector<8x8xf32>
    %42 = tpu.matmul %39, %40, %cst_27 {dimension_numbers = #tpu.dot_dimension_numbers<[1], [1], [0], [0], [0, 0, 1, 0], [], []>} : vector<8x8xf32>, vector<8x8xf32>, vector<8x8xf32> -> vector<8x8xf32>
    %cst_28 = arith.constant dense<0xFF800000> : vector<8xf32>
    %43 = vector.multi_reduction <maximumf>, %42, %cst_28 [1] : vector<8x8xf32> to vector<8xf32>
    %44 = vector.shape_cast %43 : vector<8xf32> to vector<8x1xf32>
    %45 = vector.broadcast %44 : vector<8x1xf32> to vector<8x8xf32>
    %46 = arith.subf %42, %45 : vector<8x8xf32>
    %47 = math.exp %46 : vector<8x8xf32>
    %cst_29 = arith.constant dense<0.000000e+00> : vector<8xf32>
    %48 = vector.multi_reduction <add>, %47, %cst_29 [1] : vector<8x8xf32> to vector<8xf32>
    %49 = vector.shape_cast %48 : vector<8xf32> to vector<8x1xf32>
    %cst_30 = arith.constant dense<0.000000e+00> : vector<8x8xf32>
    %50 = tpu.matmul %47, %41, %cst_30 {dimension_numbers = #tpu.dot_dimension_numbers<[1], [0], [0], [1], [0, 0, 1, 1], [], []>} : vector<8x8xf32>, vector<8x8xf32>, vector<8x8xf32> -> vector<8x8xf32>
    %51 = tpu.reciprocal %49 : vector<8x1xf32> -> vector<8x1xf32>
    %52 = vector.broadcast %51 : vector<8x1xf32> to vector<8x8xf32>
    %53 = arith.mulf %50, %52 : vector<8x8xf32>
    %c0_31 = arith.constant 0 : index
    %c16_32 = arith.constant 16 : index
    %54 = vector.load %arg11[%c0_31, %c16_32] : memref<8x32xf32, #tpu.memory_space<vmem>>, vector<8x8xf32>
    tpu.vector_store %arg11[%c0_31, %c16_32], %53 {strides = array<i32>} : memref<8x32xf32, #tpu.memory_space<vmem>>, vector<8x8xf32>,
    %55 = vector.extract_strided_slice %6 {offsets = [0, 24], sizes = [8, 8], strides = [1, 1]} : vector<8x32xf32> to vector<8x8xf32>
    %c0_33 = arith.constant 0 : index
    %c24 = arith.constant 24 : index
    %56 = vector.load %arg9[%c0_33, %c24] : memref<8x32xf32, #tpu.memory_space<vmem>>, vector<8x8xf32>
    %c0_34 = arith.constant 0 : index
    %c24_35 = arith.constant 24 : index
    %57 = vector.load %arg10[%c0_34, %c24_35] : memref<8x32xf32, #tpu.memory_space<vmem>>, vector<8x8xf32>
    %cst_36 = arith.constant dense<0.000000e+00> : vector<8x8xf32>
    %58 = tpu.matmul %55, %56, %cst_36 {dimension_numbers = #tpu.dot_dimension_numbers<[1], [1], [0], [0], [0, 0, 1, 0], [], []>} : vector<8x8xf32>, vector<8x8xf32>, vector<8x8xf32> -> vector<8x8xf32>
    %cst_37 = arith.constant dense<0xFF800000> : vector<8xf32>
    %59 = vector.multi_reduction <maximumf>, %58, %cst_37 [1] : vector<8x8xf32> to vector<8xf32>
    %60 = vector.shape_cast %59 : vector<8xf32> to vector<8x1xf32>
    %61 = vector.broadcast %60 : vector<8x1xf32> to vector<8x8xf32>
    %62 = arith.subf %58, %61 : vector<8x8xf32>
    %63 = math.exp %62 : vector<8x8xf32>
    %cst_38 = arith.constant dense<0.000000e+00> : vector<8xf32>
    %64 = vector.multi_reduction <add>, %63, %cst_38 [1] : vector<8x8xf32> to vector<8xf32>
    %65 = vector.shape_cast %64 : vector<8xf32> to vector<8x1xf32>
    %cst_39 = arith.constant dense<0.000000e+00> : vector<8x8xf32>
    %66 = tpu.matmul %63, %57, %cst_39 {dimension_numbers = #tpu.dot_dimension_numbers<[1], [0], [0], [1], [0, 0, 1, 1], [], []>} : vector<8x8xf32>, vector<8x8xf32>, vector<8x8xf32> -> vector<8x8xf32>
    %67 = tpu.reciprocal %65 : vector<8x1xf32> -> vector<8x1xf32>
    %68 = vector.broadcast %67 : vector<8x1xf32> to vector<8x8xf32>
    %69 = arith.mulf %66, %68 : vector<8x8xf32>
    %c0_40 = arith.constant 0 : index
    %c24_41 = arith.constant 24 : index
    %70 = vector.load %arg11[%c0_40, %c24_41] : memref<8x32xf32, #tpu.memory_space<vmem>>, vector<8x8xf32>
    tpu.vector_store %arg11[%c0_40, %c24_41], %69 {strides = array<i32>} : memref<8x32xf32, #tpu.memory_space<vmem>>, vector<8x8xf32>,
    %c0_42 = arith.constant 0 : index
    %c0_43 = arith.constant 0 : index
    %71 = vector.load %arg11[%c0_42, %c0_43] : memref<8x32xf32, #tpu.memory_space<vmem>>, vector<8x32xf32>
    %c0_44 = arith.constant 0 : index
    %c0_45 = arith.constant 0 : index
    %72 = vector.load %arg6[%c0_44, %c0_45] : memref<32x32xf32, #tpu.memory_space<vmem>>, vector<32x32xf32>
    %cst_46 = arith.constant dense<0.000000e+00> : vector<8x32xf32>
    %73 = tpu.matmul %71, %72, %cst_46 {dimension_numbers = #tpu.dot_dimension_numbers<[1], [0], [0], [1], [0, 0, 1, 1], [], []>} : vector<8x32xf32>, vector<32x32xf32>, vector<8x32xf32> -> vector<8x32xf32>
    %c0_47 = arith.constant 0 : index
    %c0_48 = arith.constant 0 : index
    %74 = vector.load %arg7[%c0_47, %c0_48] : memref<1x32xf32, #tpu.memory_space<vmem>>, vector<1x32xf32>
    %75 = vector.broadcast %74 : vector<1x32xf32> to vector<8x32xf32>
    %76 = arith.addf %73, %75 : vector<8x32xf32>
    %c0_49 = arith.constant 0 : index
    %c0_50 = arith.constant 0 : index
    %c0_51 = arith.constant 0 : index
    %77 = vector.load %arg8[%c0_49, %c0_50, %c0_51] : memref<1x8x32xf32, #tpu.memory_space<vmem>>, vector<1x8x32xf32>
    %78 = vector.shape_cast %77 : vector<1x8x32xf32> to vector<8x32xf32>
    %79 = vector.shape_cast %76 : vector<8x32xf32> to vector<1x8x32xf32>
    tpu.vector_store %arg8[%c0_49, %c0_50, %c0_51], %79 {strides = array<i32>} : memref<1x8x32xf32, #tpu.memory_space<vmem>>, vector<1x8x32xf32>,
    return
  }
  func.func @transform_0(%arg0: i32, %arg1: i32) -> (i32, i32, i32) {
    %c0_i32 = arith.constant 0 : i32
    %c0_i32_0 = arith.constant 0 : i32
    %c0_i32_1 = arith.constant 0 : i32
    return %arg0, %c0_i32, %c0_i32_0 : i32, i32, i32
  }
  func.func @transform_1(%arg0: i32, %arg1: i32) -> (i32, i32) {
    %c0_i32 = arith.constant 0 : i32
    %c0_i32_0 = arith.constant 0 : i32
    %c0_i32_1 = arith.constant 0 : i32
    return %c0_i32, %c0_i32_0 : i32, i32
  }
  func.func @transform_2(%arg0: i32, %arg1: i32) -> (i32, i32) {
    %c0_i32 = arith.constant 0 : i32
    %c0_i32_0 = arith.constant 0 : i32
    %c0_i32_1 = arith.constant 0 : i32
    return %c0_i32, %c0_i32_0 : i32, i32
  }
  func.func @transform_3(%arg0: i32, %arg1: i32) -> (i32, i32) {
    %c0_i32 = arith.constant 0 : i32
    %c0_i32_0 = arith.constant 0 : i32
    %c0_i32_1 = arith.constant 0 : i32
    return %c0_i32, %c0_i32_0 : i32, i32
  }
  func.func @transform_4(%arg0: i32, %arg1: i32) -> (i32, i32) {
    %c0_i32 = arith.constant 0 : i32
    %c0_i32_0 = arith.constant 0 : i32
    %c0_i32_1 = arith.constant 0 : i32
    return %c0_i32, %c0_i32_0 : i32, i32
  }
  func.func @transform_5(%arg0: i32, %arg1: i32) -> (i32, i32) {
    %c0_i32 = arith.constant 0 : i32
    %c0_i32_0 = arith.constant 0 : i32
    %c0_i32_1 = arith.constant 0 : i32
    return %c0_i32, %c0_i32_0 : i32, i32
  }
  func.func @transform_6(%arg0: i32, %arg1: i32) -> (i32, i32, i32) {
    %c0_i32 = arith.constant 0 : i32
    %c0_i32_0 = arith.constant 0 : i32
    return %arg0, %arg1, %c0_i32 : i32, i32, i32
  }
}

</mosaic_0001>

<llo_original>
// kernel: tpu_custom_call.1
$region0: #{tpu_custom_call.1}
  #allocation0 [shape = 'u32[]', space=smem, size = 0x4, offset = 0x4, fixed_abs, tag = 'smem constant byte address 0x4 - core index']
  #allocation1 [shape = 'u32[72,128]{1,0:T(1,128)}', space=vmem, size = 0x9000, scoped, tag = 'internal scratch']
  #allocation2 [shape = 'f32[8,32]{1,0:T(8,128)}', space=vmem, size = 0x1000, scoped, tag = 'scratch operand']
  #allocation3 [shape = 'f32[8,32]{1,0:T(8,128)}', space=vmem, size = 0x1000, scoped, tag = 'scratch operand']
  #allocation4 [shape = 'f32[8,32]{1,0:T(8,128)}', space=vmem, size = 0x1000, scoped, tag = 'scratch operand']
  %s0 = inlined_call_operand.hbm [shape: f32[2,8,32], index: 0, kind: input, shape index: {}]
  %s1 = inlined_call_operand.hbm [shape: f32[32,32], index: 1, kind: input, shape index: {}]
  %s2 = inlined_call_operand.hbm [shape: f32[32,32], index: 2, kind: input, shape index: {}]
  %s3 = inlined_call_operand.hbm [shape: f32[32,32], index: 3, kind: input, shape index: {}]
  %s4 = inlined_call_operand.hbm [shape: f32[32,32], index: 4, kind: input, shape index: {}]
  %s5 = inlined_call_operand.vmem [shape: f32[1,32], index: 5, kind: input, shape index: {}]
  %s6 = inlined_call_operand.hbm [shape: f32[2,8,32], index: 6, kind: output, shape index: {}]
  %s7 = sld [smem:[#allocation0]]
  $region81: #{tpu_custom_call.1} parent=0
    _
  %s9 = ssub.s32 1, %s7
  %s10 = scalar_select 0, %s9, %s7
  $region1: #{tpu_custom_call.1} parent=0
    #allocation5 [shape = 'u8[8192]{0}', space=vmem, size = 0x2000, scoped, tag = 'input window, operand 0']
    #allocation6 [shape = 's32[2]{0}', space=sflag, size = 0x8, scoped, tag = 'scoped memory for tpu_custom_call.1']
    #allocation7 [shape = 's32[2]{0}', space=sflag, size = 0x8, scoped, tag = 'scoped memory for tpu_custom_call.1']
    #allocation8 [shape = 'u8[16384]{0}', space=vmem, size = 0x4000, scoped, tag = 'input window, operand 1, single buffered']
    #allocation9 [shape = 's32[1]{0}', space=sflag, size = 0x4, scoped, tag = 'scoped memory for tpu_custom_call.1']
    #allocation10 [shape = 'u8[16384]{0}', space=vmem, size = 0x4000, scoped, tag = 'input window, operand 2, single buffered']
    #allocation11 [shape = 'u8[16384]{0}', space=vmem, size = 0x4000, scoped, tag = 'input window, operand 3, single buffered']
    #allocation12 [shape = 's32[1]{0}', space=sflag, size = 0x4, scoped, tag = 'scoped memory for tpu_custom_call.1']
    #allocation13 [shape = 'u8[16384]{0}', space=vmem, size = 0x4000, scoped, tag = 'input window, operand 4, single buffered']
    #allocation14 [shape = 'u8[8192]{0}', space=vmem, size = 0x2000, scoped, tag = 'output window, operand 0']
    %11 = vsyncpa [#allocation6], 0
    %s12 = scalar_lea.sflag [#allocation6], 1
    %13 = vsyncpa %s12, 0
    %14 = vsyncpa [#allocation9], 0
    %15 = vsyncpa [#allocation12], 0
    %16 = vsyncpa [#allocation7], 0
    %s17 = scalar_lea.sflag [#allocation7], 1
    %18 = vsyncpa %s17, 0
    loop: start=0, step=1, limit=4
    $region2: #{tpu_custom_call.1} parent=1 // loop_pre_header
      _
    $region3: #{tpu_custom_call.1} parent=1 // loop_header
      %s20 = sphi 0, %s24
      %p21 = scmp.ge.s32.totalorder %s20, 4
      %s27 = sphi 0, %s39
      %s28 = sphi 0, %s35
      %s29 = sphi 0, %s27
      %s30 = sphi 0, %s28
      %s31 = sphi 0, %s29
      %s32 = sphi 0, %s30
      %s42 = sphi 0, %s44
      %s45 = sphi 0, %s42
      %s46 = sphi 0, %s45
      %s62 = sphi 0, %s46
      %s66 = sphi 0, %s66
      %s68 = sphi 0, %s66
      %s69 = sphi 0, %s68
      %s83 = sphi 0, %s69
      %s87 = sphi 0, %s87
      %s89 = sphi 0, %s87
      %s90 = sphi 0, %s89
      %s104 = sphi 0, %s90
      %s108 = sphi 0, %s108
      %s110 = sphi 0, %s108
      %s111 = sphi 0, %s110
      %s125 = sphi 0, %s111
      %s129 = sphi 0, %s129
      %s131 = sphi 0, %s129
      %s132 = sphi 0, %s131
      %s146 = sphi 0, %s132
      %s150 = sphi 0, %s150
      %s152 = sphi 0, %s150
      %s153 = sphi 0, %s152
      %s167 = sphi 0, %s153
      %s175 = sphi 0, %s177
      %s178 = sphi 0, %s175
      %s179 = sphi 0, %s178
      %s195 = sphi 0, %s179
    $region4: #{tpu_custom_call.1} parent=1 // loop_header_branch
      %23 = sbr.rel (%p21) target = $region8
    $region5: #{tpu_custom_call.1} parent=1 // loop_body
      %s25 = ssub.s32 %s20, 1
      %s26 = ssub.s32 %s20, 2
      %s33 = sadd.s32 1, %s28
      %p34 = scmp.ge.s32.totalorder %s33, 1
      %s35 = scalar_select %p34, 0, %s33
      %s36 = sadd.s32 1, %s27
      %s37 = scalar_select %p34, %s36, %s27
      %p38 = scmp.ge.s32.totalorder %s37, 2
      %s39 = scalar_select %p38, 0, %s37
      %s40 = ssub.s32 %s27, %s39
      %p41 = scmp.eq.s32.totalorder %s40, 0
      %s43 = sadd.s32 %s42, 1
      %s44 = scalar_select %p41, %s42, %s43
      %p47 = pneg %p41
      %p48 = scmp.eq.s32.totalorder %s20, 1
      %p49 = por %p47, %p48
      %p50 = scmp.ne.s32.totalorder %s42, %s45
      %p51 = scmp.eq.s32.totalorder %s20, 0
      %p52 = por %p50, %p51
      %p53 = scmp.ne.s32.totalorder %s42, %s45
      %p54 = scmp.eq.s32.totalorder %s25, 1
      %p55 = por %p53, %p54
      %p56 = scmp.ne.s32.totalorder %s45, %s46
      %p57 = scmp.eq.s32.totalorder %s25, 0
      %p58 = por %p56, %p57
      %p59 = scmp.ne.s32.totalorder %s45, %s46
      %p60 = scmp.eq.s32.totalorder %s26, 1
      %p61 = por %p59, %p60
      %p63 = scmp.ne.s32.totalorder %s46, %s62
      %p64 = scmp.eq.s32.totalorder %s26, 0
      %p65 = por %p63, %p64
      %s67 = sadd.s32 %s66, 1
      %p70 = scmp.eq.s32.totalorder %s20, 1
      %p71 = scmp.ne.s32.totalorder %s66, %s68
      %p72 = scmp.eq.s32.totalorder %s20, 0
      %p73 = por %p71, %p72
      %p74 = scmp.ne.s32.totalorder %s66, %s68
      %p75 = scmp.eq.s32.totalorder %s25, 1
      %p76 = por %p74, %p75
      %p77 = scmp.ne.s32.totalorder %s68, %s69
      %p78 = scmp.eq.s32.totalorder %s25, 0
      %p79 = por %p77, %p78
      %p80 = scmp.ne.s32.totalorder %s68, %s69
      %p81 = scmp.eq.s32.totalorder %s26, 1
      %p82 = por %p80, %p81
      %p84 = scmp.ne.s32.totalorder %s69, %s83
      %p85 = scmp.eq.s32.totalorder %s26, 0
      %p86 = por %p84, %p85
      %s88 = sadd.s32 %s87, 1
      %p91 = scmp.eq.s32.totalorder %s20, 1
      %p92 = scmp.ne.s32.totalorder %s87, %s89
      %p93 = scmp.eq.s32.totalorder %s20, 0
      %p94 = por %p92, %p93
      %p95 = scmp.ne.s32.totalorder %s87, %s89
      %p96 = scmp.eq.s32.totalorder %s25, 1
      %p97 = por %p95, %p96
      %p98 = scmp.ne.s32.totalorder %s89, %s90
      %p99 = scmp.eq.s32.totalorder %s25, 0
      %p100 = por %p98, %p99
      %p101 = scmp.ne.s32.totalorder %s89, %s90
      %p102 = scmp.eq.s32.totalorder %s26, 1
      %p103 = por %p101, %p102
      %p105 = scmp.ne.s32.totalorder %s90, %s104
      %p106 = scmp.eq.s32.totalorder %s26, 0
      %p107 = por %p105, %p106
      %s109 = sadd.s32 %s108, 1
      %p112 = scmp.eq.s32.totalorder %s20, 1
      %p113 = scmp.ne.s32.totalorder %s108, %s110
      %p114 = scmp.eq.s32.totalorder %s20, 0
      %p115 = por %p113, %p114
      %p116 = scmp.ne.s32.totalorder %s108, %s110
      %p117 = scmp.eq.s32.totalorder %s25, 1
      %p118 = por %p116, %p117
      %p119 = scmp.ne.s32.totalorder %s110, %s111
      %p120 = scmp.eq.s32.totalorder %s25, 0
      %p121 = por %p119, %p120
      %p122 = scmp.ne.s32.totalorder %s110, %s111
      %p123 = scmp.eq.s32.totalorder %s26, 1
      %p124 = por %p122, %p123
      %p126 = scmp.ne.s32.totalorder %s111, %s125
      %p127 = scmp.eq.s32.totalorder %s26, 0
      %p128 = por %p126, %p127
      %s130 = sadd.s32 %s129, 1
      %p133 = scmp.eq.s32.totalorder %s20, 1
      %p134 = scmp.ne.s32.totalorder %s129, %s131
      %p135 = scmp.eq.s32.totalorder %s20, 0
      %p136 = por %p134, %p135
      %p137 = scmp.ne.s32.totalorder %s129, %s131
      %p138 = scmp.eq.s32.totalorder %s25, 1
      %p139 = por %p137, %p138
      %p140 = scmp.ne.s32.totalorder %s131, %s132
      %p141 = scmp.eq.s32.totalorder %s25, 0
      %p142 = por %p140, %p141
      %p143 = scmp.ne.s32.totalorder %s131, %s132
      %p144 = scmp.eq.s32.totalorder %s26, 1
      %p145 = por %p143, %p144
      %p147 = scmp.ne.s32.totalorder %s132, %s146
      %p148 = scmp.eq.s32.totalorder %s26, 0
      %p149 = por %p147, %p148
      %s151 = sadd.s32 %s150, 1
      %p154 = scmp.eq.s32.totalorder %s20, 1
      %p155 = scmp.ne.s32.totalorder %s150, %s152
      %p156 = scmp.eq.s32.totalorder %s20, 0
      %p157 = por %p155, %p156
      %p158 = scmp.ne.s32.totalorder %s150, %s152
      %p159 = scmp.eq.s32.totalorder %s25, 1
      %p160 = por %p158, %p159
      %p161 = scmp.ne.s32.totalorder %s152, %s153
      %p162 = scmp.eq.s32.totalorder %s25, 0
      %p163 = por %p161, %p162
      %p164 = scmp.ne.s32.totalorder %s152, %s153
      %p165 = scmp.eq.s32.totalorder %s26, 1
      %p166 = por %p164, %p165
      %p168 = scmp.ne.s32.totalorder %s153, %s167
      %p169 = scmp.eq.s32.totalorder %s26, 0
      %p170 = por %p168, %p169
      %s171 = ssub.s32 %s27, %s39
      %s172 = ssub.s32 %s28, %s35
      %s173 = sor.u32 %s171, %s172
      %p174 = scmp.eq.s32.totalorder %s173, 0
      %s176 = sadd.s32 %s175, 1
      %s177 = scalar_select %p174, %s175, %s176
      %p180 = pneg %p174
      %p181 = scmp.eq.s32.totalorder %s20, 1
      %p182 = por %p180, %p181
      %p183 = scmp.ne.s32.totalorder %s175, %s178
      %p184 = scmp.eq.s32.totalorder %s20, 0
      %p185 = por %p183, %p184
      %p186 = scmp.ne.s32.totalorder %s175, %s178
      %p187 = scmp.eq.s32.totalorder %s25, 1
      %p188 = por %p186, %p187
      %p189 = scmp.ne.s32.totalorder %s178, %s179
      %p190 = scmp.eq.s32.totalorder %s25, 0
      %p191 = por %p189, %p190
      %p192 = scmp.ne.s32.totalorder %s178, %s179
      %p193 = scmp.eq.s32.totalorder %s26, 1
      %p194 = por %p192, %p193
      %p196 = scmp.ne.s32.totalorder %s179, %s195
      %p197 = scmp.eq.s32.totalorder %s26, 0
      %p198 = por %p196, %p197
      %p199 = scmp.le.s32.totalorder 1, %s20
      %p200 = scmp.lt.s32.totalorder %s20, 3
      %p201 = pnand %p199, %p200
      %p202 = pneg %p201
      // Predicated region
      $region9: #{tpu_custom_call.1} parent=5 // pred_check
        _
      $region10: #{tpu_custom_call.1} parent=5 // pred_check_branch
        %204 = sbr.rel (%p201) target = $region12
      $region11: #{tpu_custom_call.1} parent=5 // pred_region
        %s205 = ssub.s32 %s20, 1
        // Predicated region
        $region13: #{tpu_custom_call.1} parent=11 // pred_check
          %p206 = pneg %p79
        $region14: #{tpu_custom_call.1} parent=11 // pred_check_branch
          %208 = sbr.rel (%p206) target = $region16
        $region15: #{tpu_custom_call.1} parent=11 // pred_region
          %210 = vsyncadd [#allocation9], 0
          %s211 = sshll.u32 %s1, 4
          %s212 = int_to_ptr.hbm [resolvable:$true] %s211
          %s213 = sshll.u32 [#allocation8], 4
          %s214 = int_to_ptr.vmem [resolvable:$true] %s213
          %219 = dma.hbm_to_vmem [thread:$0]  %s212, 512, %s214, [#allocation9], 128, 128, 8
        $region16: #{tpu_custom_call.1} parent=11 // pred_fallthru
          _
        // Predicated region
        $region17: #{tpu_custom_call.1} parent=11 // pred_check
          %p220 = pneg %p100
        $region18: #{tpu_custom_call.1} parent=11 // pred_check_branch
          %222 = sbr.rel (%p220) target = $region20
        $region19: #{tpu_custom_call.1} parent=11 // pred_region
          %224 = vsyncadd [#allocation9], 0
          %s225 = sshll.u32 %s2, 4
          %s226 = int_to_ptr.hbm [resolvable:$true] %s225
          %s227 = sshll.u32 [#allocation10], 4
          %s228 = int_to_ptr.vmem [resolvable:$true] %s227
          %233 = dma.hbm_to_vmem [thread:$0]  %s226, 512, %s228, [#allocation9], 128, 128, 8
        $region20: #{tpu_custom_call.1} parent=11 // pred_fallthru
          _
        // Predicated region
        $region21: #{tpu_custom_call.1} parent=11 // pred_check
          %p234 = pneg %p121
        $region22: #{tpu_custom_call.1} parent=11 // pred_check_branch
          %236 = sbr.rel (%p234) target = $region24
        $region23: #{tpu_custom_call.1} parent=11 // pred_region
          %238 = vsyncadd [#allocation12], 0
          %s239 = sshll.u32 %s3, 4
          %s240 = int_to_ptr.hbm [resolvable:$true] %s239
          %s241 = sshll.u32 [#allocation11], 4
          %s242 = int_to_ptr.vmem [resolvable:$true] %s241
          %247 = dma.hbm_to_vmem [thread:$0]  %s240, 512, %s242, [#allocation12], 128, 128, 8
        $region24: #{tpu_custom_call.1} parent=11 // pred_fallthru
          _
        // Predicated region
        $region25: #{tpu_custom_call.1} parent=11 // pred_check
          %p248 = pneg %p142
        $region26: #{tpu_custom_call.1} parent=11 // pred_check_branch
          %250 = sbr.rel (%p248) target = $region28
        $region27: #{tpu_custom_call.1} parent=11 // pred_region
          %252 = vsyncadd [#allocation12], 0
          %s253 = sshll.u32 %s4, 4
          %s254 = int_to_ptr.hbm [resolvable:$true] %s253
          %s255 = sshll.u32 [#allocation13], 4
          %s256 = int_to_ptr.vmem [resolvable:$true] %s255
          %261 = dma.hbm_to_vmem [thread:$0]  %s254, 512, %s256, [#allocation12], 128, 128, 8
        $region28: #{tpu_custom_call.1} parent=11 // pred_fallthru
          _
        // Predicated region
        $region29: #{tpu_custom_call.1} parent=11 // pred_check
          %p262 = pneg %p163
        $region30: #{tpu_custom_call.1} parent=11 // pred_check_branch
          %264 = sbr.rel (%p262) target = $region32
        $region31: #{tpu_custom_call.1} parent=11 // pred_region
          _
        $region32: #{tpu_custom_call.1} parent=11 // pred_fallthru
          _
      $region12: #{tpu_custom_call.1} parent=5 // pred_fallthru
        _
      %p265 = scmp.lt.s32.totalorder %s20, 2
      // Predicated region
      $region33: #{tpu_custom_call.1} parent=5 // pred_check
        %p266 = pneg %p265
      $region34: #{tpu_custom_call.1} parent=5 // pred_check_branch
        %268 = sbr.rel (%p266) target = $region36
      $region35: #{tpu_custom_call.1} parent=5 // pred_region
        // Predicated region
        $region37: #{tpu_custom_call.1} parent=35 // pred_check
          %p269 = pneg %p52
        $region38: #{tpu_custom_call.1} parent=35 // pred_check_branch
          %271 = sbr.rel (%p269) target = $region40
        $region39: #{tpu_custom_call.1} parent=35 // pred_region
          %s272 = sand.u32 %s42, 1
          %s273 = scalar_lea.sflag [#allocation6], %s272
          %s274 = sand.u32 %s42, 1
          %s275 = smul.addr %s274, 8
          %s276 = scalar_lea.vmem [#allocation5], %s275
          %278 = vsyncadd %s273, 0
          %s279 = smul.addr %s27, 8
          %s280 = scalar_lea.hbm %s0, %s279
          %s282 = sshll.u32 %s280, 4
          %s283 = int_to_ptr.hbm [resolvable:$true] %s282
          %s284 = sshll.u32 %s276, 4
          %s285 = int_to_ptr.vmem [resolvable:$true] %s284
          %287 = dma.hbm_to_vmem [thread:$0]  %s283, 128, %s285, %s273
        $region40: #{tpu_custom_call.1} parent=35 // pred_fallthru
          _
      $region36: #{tpu_custom_call.1} parent=5 // pred_fallthru
        _
      %p288 = scmp.le.s32.totalorder 1, %s20
      %p289 = scmp.lt.s32.totalorder %s20, 3
      %p290 = pnand %p288, %p289
      %p291 = pneg %p290
      // Predicated region
      $region41: #{tpu_custom_call.1} parent=5 // pred_check
        _
      $region42: #{tpu_custom_call.1} parent=5 // pred_check_branch
        %293 = sbr.rel (%p290) target = $region44
      $region43: #{tpu_custom_call.1} parent=5 // pred_region
        %s294 = ssub.s32 %s20, 1
        %s295 = sand.u32 %s45, 1
        %s296 = scalar_lea.sflag [#allocation6], %s295
        %s297 = sand.u32 %s45, 1
        %s298 = smul.addr %s297, 8
        %s299 = scalar_lea.vmem [#allocation5], %s298
        // Predicated region
        $region45: #{tpu_custom_call.1} parent=43 // pred_check
          %p300 = pneg %p58
        $region46: #{tpu_custom_call.1} parent=43 // pred_check_branch
          %302 = sbr.rel (%p300) target = $region48
        $region47: #{tpu_custom_call.1} parent=43 // pred_region
          %304 = dma.done %s296, 128
        $region48: #{tpu_custom_call.1} parent=43 // pred_fallthru
          _
        // Predicated region
        $region49: #{tpu_custom_call.1} parent=43 // pred_check
          %p305 = pneg %p79
        $region50: #{tpu_custom_call.1} parent=43 // pred_check_branch
          %307 = sbr.rel (%p305) target = $region52
        $region51: #{tpu_custom_call.1} parent=43 // pred_region
          %309 = dma.done [#allocation9], 512
        $region52: #{tpu_custom_call.1} parent=43 // pred_fallthru
          _
        // Predicated region
        $region53: #{tpu_custom_call.1} parent=43 // pred_check
          %p310 = pneg %p100
        $region54: #{tpu_custom_call.1} parent=43 // pred_check_branch
          %312 = sbr.rel (%p310) target = $region56
        $region55: #{tpu_custom_call.1} parent=43 // pred_region
          %314 = dma.done [#allocation9], 512
        $region56: #{tpu_custom_call.1} parent=43 // pred_fallthru
          _
        // Predicated region
        $region57: #{tpu_custom_call.1} parent=43 // pred_check
          %p315 = pneg %p121
        $region58: #{tpu_custom_call.1} parent=43 // pred_check_branch
          %317 = sbr.rel (%p315) target = $region60
        $region59: #{tpu_custom_call.1} parent=43 // pred_region
          %319 = dma.done [#allocation12], 512
        $region60: #{tpu_custom_call.1} parent=43 // pred_fallthru
          _
        // Predicated region
        $region61: #{tpu_custom_call.1} parent=43 // pred_check
          %p320 = pneg %p142
        $region62: #{tpu_custom_call.1} parent=43 // pred_check_branch
          %322 = sbr.rel (%p320) target = $region64
        $region63: #{tpu_custom_call.1} parent=43 // pred_region
          %324 = dma.done [#allocation12], 512
        $region64: #{tpu_custom_call.1} parent=43 // pred_fallthru
          _
        %s325 = sand.u32 %s45, 1
        %s326 = scalar_lea.sflag [#allocation6], %s325
        %s327 = sand.u32 %s45, 1
        %s328 = smul.addr %s327, 8
        %s329 = scalar_lea.vmem [#allocation5], %s328
        %p330 = pneg %p58
        %p331 = pneg %p55
        %p332 = pneg %p79
        %p333 = pneg %p76
        %p334 = pneg %p100
        %p335 = pneg %p97
        %p336 = pneg %p121
        %p337 = pneg %p118
        %p338 = pneg %p142
        %p339 = pneg %p139
        %p340 = pneg %p163
        %p341 = pneg %p160
        %p342 = pneg %p191
        %p343 = pneg %p188
        %s344 = sand.u32 %s178, 1
        %s345 = scalar_lea.sflag [#allocation7], %s344
        %s346 = sand.u32 %s178, 1
        %s347 = smul.addr %s346, 8
        %s348 = scalar_lea.vmem [#allocation14], %s347
        %p349 = scmp.eq.s32.totalorder %s30, 0
        // Predicated region
        $region65: #{tpu_custom_call.1} parent=43 // pred_check
          %p350 = pneg %p349
        $region66: #{tpu_custom_call.1} parent=43 // pred_check_branch
          %352 = sbr.rel (%p350) target = $region68
        $region67: #{tpu_custom_call.1} parent=43 // pred_region
          %v353 = vld [vmem:[%s299] sm:$0xff]
          %v354 = vld [vmem:[#allocation10] sm:$0xff]
          %v355 = vld [vmem:[#allocation10 + $0x8] sm:$0xff]
          %v356 = vld [vmem:[#allocation10 + $0x10] sm:$0xff]
          %v357 = vld [vmem:[#allocation10 + $0x18] sm:$0xff]
          %vm358 = vcmask 261120
          %v360 = vsel %vm358, %v353, 0
          %362 = vmatpush.msra.mxu0 0.0
          %363 = vmatpush.msra.mxu0 0.0
          %364 = vmatpush.msra.mxu0 0.0
          %365 = vmatpush.msra.mxu0 0.0
          %366 = vmatpush.msra.mxu0 0.0
          %367 = vmatpush.msra.mxu0 0.0
          %368 = vmatpush.msra.mxu0 0.0
          %369 = vmatpush.msra.mxu0 0.0
          %370 = vmatpush.msra.mxu0 0.0
          %371 = vmatpush.msra.mxu0 0.0
          %372 = vmatpush.msra.mxu0 0.0
          %373 = vmatpush.msra.mxu0 0.0
          %374 = vmatpush.msra.mxu0 %v357
          %375 = vmatpush.msra.mxu0 %v356
          %376 = vmatpush.msra.mxu0 %v355
          %377 = vmatpush.msra.mxu0 %v354
          %378 = vmatmul.f32.gmra.mxu0 %v360
          %v379 = vpop.f32.mrf.mxu0
          %v380 = vadd.f32 0.0, %v379
          %381 = vdwg.mxu0
          %382 = vst.msk [vmem:[#allocation2] sm:$0xff] %vm358, %v380
          %v383 = vld [vmem:[#allocation11] sm:$0xff]
          %v384 = vld [vmem:[#allocation11 + $0x8] sm:$0xff]
          %v385 = vld [vmem:[#allocation11 + $0x10] sm:$0xff]
          %v386 = vld [vmem:[#allocation11 + $0x18] sm:$0xff]
          %387 = vmatpush.msra.mxu0 0.0
          %388 = vmatpush.msra.mxu0 0.0
          %389 = vmatpush.msra.mxu0 0.0
          %390 = vmatpush.msra.mxu0 0.0
          %391 = vmatpush.msra.mxu0 0.0
          %392 = vmatpush.msra.mxu0 0.0
          %393 = vmatpush.msra.mxu0 0.0
          %394 = vmatpush.msra.mxu0 0.0
          %395 = vmatpush.msra.mxu0 0.0
          %396 = vmatpush.msra.mxu0 0.0
          %397 = vmatpush.msra.mxu0 0.0
          %398 = vmatpush.msra.mxu0 0.0
          %399 = vmatpush.msra.mxu0 %v386
          %400 = vmatpush.msra.mxu0 %v385
          %401 = vmatpush.msra.mxu0 %v384
          %402 = vmatpush.msra.mxu0 %v383
          %403 = vmatmul.f32.gmra.mxu0 %v360
          %v404 = vpop.f32.mrf.mxu0
          %v405 = vadd.f32 0.0, %v404
          %406 = vdwg.mxu0
          %407 = vst.msk [vmem:[#allocation3] sm:$0xff] %vm358, %v405
        $region68: #{tpu_custom_call.1} parent=43 // pred_fallthru
          _
        %v408 = vld [vmem:[%s299] sm:$0xff]
        %v409 = vld [vmem:[#allocation8] sm:$0xff]
        %v410 = vld [vmem:[#allocation8 + $0x8] sm:$0xff]
        %v411 = vld [vmem:[#allocation8 + $0x10] sm:$0xff]
        %v412 = vld [vmem:[#allocation8 + $0x18] sm:$0xff]
        %vm413 = vcmask 261120
        %v415 = vsel %vm413, %v408, 0
        %417 = vmatpush.msra.mxu0 0.0
        %418 = vmatpush.msra.mxu0 0.0
        %419 = vmatpush.msra.mxu0 0.0
        %420 = vmatpush.msra.mxu0 0.0
        %421 = vmatpush.msra.mxu0 0.0
        %422 = vmatpush.msra.mxu0 0.0
        %423 = vmatpush.msra.mxu0 0.0
        %424 = vmatpush.msra.mxu0 0.0
        %425 = vmatpush.msra.mxu0 0.0
        %426 = vmatpush.msra.mxu0 0.0
        %427 = vmatpush.msra.mxu0 0.0
        %428 = vmatpush.msra.mxu0 0.0
        %429 = vmatpush.msra.mxu0 %v412
        %430 = vmatpush.msra.mxu0 %v411
        %431 = vmatpush.msra.mxu0 %v410
        %432 = vmatpush.msra.mxu0 %v409
        %433 = vmatmul.f32.gmra.mxu0 %v415
        %v434 = vpop.f32.mrf.mxu0
        %v435 = vadd.f32 0.0, %v434
        %436 = vdwg.mxu0
        %v437 = vld [vmem:[#allocation2] sm:$0xff]
        %v438 = vld [vmem:[#allocation3] sm:$0xff]
        %vm439 = vcmask 64512
        %v441 = vsel %vm439, %v435, 0
        %v444 = vsel %vm439, %v437, 0
        %446 = vmatpush.xpose.msra.mxu0 0.0
        %447 = vmatpush.xpose.msra.mxu0 0.0
        %448 = vmatpush.xpose.msra.mxu0 0.0
        %449 = vmatpush.xpose.msra.mxu0 0.0
        %450 = vmatpush.xpose.msra.mxu0 0.0
        %451 = vmatpush.xpose.msra.mxu0 0.0
        %452 = vmatpush.xpose.msra.mxu0 0.0
        %453 = vmatpush.xpose.msra.mxu0 0.0
        %454 = vmatpush.xpose.msra.mxu0 0.0
        %455 = vmatpush.xpose.msra.mxu0 0.0
        %456 = vmatpush.xpose.msra.mxu0 0.0
        %457 = vmatpush.xpose.msra.mxu0 0.0
        %458 = vmatpush.xpose.msra.mxu0 0.0
        %459 = vmatpush.xpose.msra.mxu0 0.0
        %460 = vmatpush.xpose.msra.mxu0 0.0
        %461 = vmatpush.xpose.msra.mxu0 %v444
        %462 = vmatmul.f32.gmra.mxu0 %v441
        %v463 = vpop.f32.mrf.mxu0
        %v464 = vadd.f32 0.0, %v463
        %465 = vdwg.mxu0
        %v466 = vsel %vm439, %v464, -inf
        %467 = vmax.xlane.f32.xlu0 %v466
        %v468 = vpop.xlane.xlu0 %467
        %v469 = vsub.f32 %v464, %v468
        %v470 = vmul.f32 %v469, 1.442695
        %v471 = vpow.pop %v470
        %v472 = vsel %vm439, %v471, 0.0
        %473 = vadd.xlane.f32.xlu0 %v472
        %v474 = vpop.xlane.xlu0 %473
        %v476 = vsel %vm439, %v471, 0
        %478 = vmatpush.msra.mxu0 0.0
        %479 = vmatpush.msra.mxu0 0.0
        %480 = vmatpush.msra.mxu0 0.0
        %481 = vmatpush.msra.mxu0 0.0
        %482 = vmatpush.msra.mxu0 0.0
        %483 = vmatpush.msra.mxu0 0.0
        %484 = vmatpush.msra.mxu0 0.0
        %485 = vmatpush.msra.mxu0 0.0
        %486 = vmatpush.msra.mxu0 0.0
        %487 = vmatpush.msra.mxu0 0.0
        %488 = vmatpush.msra.mxu0 0.0
        %489 = vmatpush.msra.mxu0 0.0
        %490 = vmatpush.msra.mxu0 0.0
        %491 = vmatpush.msra.mxu0 0.0
        %492 = vmatpush.msra.mxu0 0.0
        %493 = vmatpush.msra.mxu0 %v438
        %494 = vmatmul.f32.gmra.mxu0 %v476
        %v495 = vpop.f32.mrf.mxu0
        %v496 = vadd.f32 0.0, %v495
        %497 = vdwg.mxu0
        %v498 = vrcp.pop %v474
        %v499 = vmul.f32 %v474, %v498
        %v500 = vsub.f32 1.0, %v499
        %v501 = vmul.f32 %v498, %v500
        %v502 = vadd.f32 %v498, %v501
        %vm503 = vweird.f32 %v474
        %vm504 = vweird.f32 %v498
        %vm505 = vmor %vm503, %vm504
        %v506 = vsel %vm505, %v498, %v502
        %v507 = vand.u32 2147483647, %v474
        %vm508 = vcmp.eq.f32.partialorder %v507, 8.507059e+37
        %v509 = vand.u32 %v474, 2147483648
        %v510 = vor.u32 1.1754944e-38, %v509
        %v511 = vsel %vm508, %v510, %v506
        %v512 = vmul.f32 %v496, %v511
        %513 = vst.msk [vmem:[#allocation4] sm:$0xff] %vm439, %v512
        %v514 = vld [vmem:[#allocation2] sm:$0xff]
        %v515 = vld [vmem:[#allocation3] sm:$0xff]
        %516 = vrot.lane.b32.xlu0 %v435, 120
        %v517 = vpop.permute.xlu0 %516
        %519 = vrot.lane.b32.xlu0 %v514, 120
        %v520 = vpop.permute.xlu0 %519
        %v521 = vsel %vm439, %v517, 0
        %v523 = vsel %vm439, %v520, 0
        %525 = vmatpush.xpose.msra.mxu0 0.0
        %526 = vmatpush.xpose.msra.mxu0 0.0
        %527 = vmatpush.xpose.msra.mxu0 0.0
        %528 = vmatpush.xpose.msra.mxu0 0.0
        %529 = vmatpush.xpose.msra.mxu0 0.0
        %530 = vmatpush.xpose.msra.mxu0 0.0
        %531 = vmatpush.xpose.msra.mxu0 0.0
        %532 = vmatpush.xpose.msra.mxu0 0.0
        %533 = vmatpush.xpose.msra.mxu0 0.0
        %534 = vmatpush.xpose.msra.mxu0 0.0
        %535 = vmatpush.xpose.msra.mxu0 0.0
        %536 = vmatpush.xpose.msra.mxu0 0.0
        %537 = vmatpush.xpose.msra.mxu0 0.0
        %538 = vmatpush.xpose.msra.mxu0 0.0
        %539 = vmatpush.xpose.msra.mxu0 0.0
        %540 = vmatpush.xpose.msra.mxu0 %v523
        %541 = vmatmul.f32.gmra.mxu0 %v521
        %v542 = vpop.f32.mrf.mxu0
        %v543 = vadd.f32 0.0, %v542
        %544 = vdwg.mxu0
        %v545 = vsel %vm439, %v543, -inf
        %546 = vmax.xlane.f32.xlu0 %v545
        %v547 = vpop.xlane.xlu0 %546
        %v548 = vsub.f32 %v543, %v547
        %v549 = vmul.f32 %v548, 1.442695
        %v550 = vpow.pop %v549
        %v551 = vsel %vm439, %v550, 0.0
        %552 = vadd.xlane.f32.xlu0 %v551
        %v553 = vpop.xlane.xlu0 %552
        %555 = vrot.lane.b32.xlu0 %v515, 120
        %v556 = vpop.permute.xlu0 %555
        %v559 = vsel %vm439, %v550, 0
        %561 = vmatpush.msra.mxu0 0.0
        %562 = vmatpush.msra.mxu0 0.0
        %563 = vmatpush.msra.mxu0 0.0
        %564 = vmatpush.msra.mxu0 0.0
        %565 = vmatpush.msra.mxu0 0.0
        %566 = vmatpush.msra.mxu0 0.0
        %567 = vmatpush.msra.mxu0 0.0
        %568 = vmatpush.msra.mxu0 0.0
        %569 = vmatpush.msra.mxu0 0.0
        %570 = vmatpush.msra.mxu0 0.0
        %571 = vmatpush.msra.mxu0 0.0
        %572 = vmatpush.msra.mxu0 0.0
        %573 = vmatpush.msra.mxu0 0.0
        %574 = vmatpush.msra.mxu0 0.0
        %575 = vmatpush.msra.mxu0 0.0
        %576 = vmatpush.msra.mxu0 %v556
        %577 = vmatmul.f32.gmra.mxu0 %v559
        %v578 = vpop.f32.mrf.mxu0
        %v579 = vadd.f32 0.0, %v578
        %580 = vdwg.mxu0
        %v581 = vrcp.pop %v553
        %v582 = vmul.f32 %v553, %v581
        %v583 = vsub.f32 1.0, %v582
        %v584 = vmul.f32 %v581, %v583
        %v585 = vadd.f32 %v581, %v584
        %vm586 = vweird.f32 %v553
        %vm587 = vweird.f32 %v581
        %vm588 = vmor %vm586, %vm587
        %v589 = vsel %vm588, %v581, %v585
        %v590 = vand.u32 2147483647, %v553
        %vm591 = vcmp.eq.f32.partialorder %v590, 8.507059e+37
        %v592 = vand.u32 %v553, 2147483648
        %v593 = vor.u32 1.1754944e-38, %v592
        %v594 = vsel %vm591, %v593, %v589
        %v595 = vmul.f32 %v579, %v594
        %597 = vrot.lane.b32.xlu0 %v595, 8
        %v598 = vpop.permute.xlu0 %597
        %vm600 = vcmask 130112
        %601 = vst.msk [vmem:[#allocation4] sm:$0xff] %vm600, %v598
        %v602 = vld [vmem:[#allocation2] sm:$0xff]
        %v603 = vld [vmem:[#allocation3] sm:$0xff]
        %604 = vrot.lane.b32.xlu0 %v435, 112
        %v605 = vpop.permute.xlu0 %604
        %607 = vrot.lane.b32.xlu0 %v602, 112
        %v608 = vpop.permute.xlu0 %607
        %v609 = vsel %vm439, %v605, 0
        %v611 = vsel %vm439, %v608, 0
        %613 = vmatpush.xpose.msra.mxu0 0.0
        %614 = vmatpush.xpose.msra.mxu0 0.0
        %615 = vmatpush.xpose.msra.mxu0 0.0
        %616 = vmatpush.xpose.msra.mxu0 0.0
        %617 = vmatpush.xpose.msra.mxu0 0.0
        %618 = vmatpush.xpose.msra.mxu0 0.0
        %619 = vmatpush.xpose.msra.mxu0 0.0
        %620 = vmatpush.xpose.msra.mxu0 0.0
        %621 = vmatpush.xpose.msra.mxu0 0.0
        %622 = vmatpush.xpose.msra.mxu0 0.0
        %623 = vmatpush.xpose.msra.mxu0 0.0
        %624 = vmatpush.xpose.msra.mxu0 0.0
        %625 = vmatpush.xpose.msra.mxu0 0.0
        %626 = vmatpush.xpose.msra.mxu0 0.0
        %627 = vmatpush.xpose.msra.mxu0 0.0
        %628 = vmatpush.xpose.msra.mxu0 %v611
        %629 = vmatmul.f32.gmra.mxu0 %v609
        %v630 = vpop.f32.mrf.mxu0
        %v631 = vadd.f32 0.0, %v630
        %632 = vdwg.mxu0
        %v633 = vsel %vm439, %v631, -inf
        %634 = vmax.xlane.f32.xlu0 %v633
        %v635 = vpop.xlane.xlu0 %634
        %v636 = vsub.f32 %v631, %v635
        %v637 = vmul.f32 %v636, 1.442695
        %v638 = vpow.pop %v637
        %v639 = vsel %vm439, %v638, 0.0
        %640 = vadd.xlane.f32.xlu0 %v639
        %v641 = vpop.xlane.xlu0 %640
        %643 = vrot.lane.b32.xlu0 %v603, 112
        %v644 = vpop.permute.xlu0 %643
        %v647 = vsel %vm439, %v638, 0
        %649 = vmatpush.msra.mxu0 0.0
        %650 = vmatpush.msra.mxu0 0.0
        %651 = vmatpush.msra.mxu0 0.0
        %652 = vmatpush.msra.mxu0 0.0
        %653 = vmatpush.msra.mxu0 0.0
        %654 = vmatpush.msra.mxu0 0.0
        %655 = vmatpush.msra.mxu0 0.0
        %656 = vmatpush.msra.mxu0 0.0
        %657 = vmatpush.msra.mxu0 0.0
        %658 = vmatpush.msra.mxu0 0.0
        %659 = vmatpush.msra.mxu0 0.0
        %660 = vmatpush.msra.mxu0 0.0
        %661 = vmatpush.msra.mxu0 0.0
        %662 = vmatpush.msra.mxu0 0.0
        %663 = vmatpush.msra.mxu0 0.0
        %664 = vmatpush.msra.mxu0 %v644
        %665 = vmatmul.f32.gmra.mxu0 %v647
        %v666 = vpop.f32.mrf.mxu0
        %v667 = vadd.f32 0.0, %v666
        %668 = vdwg.mxu0
        %v669 = vrcp.pop %v641
        %v670 = vmul.f32 %v641, %v669
        %v671 = vsub.f32 1.0, %v670
        %v672 = vmul.f32 %v669, %v671
        %v673 = vadd.f32 %v669, %v672
        %vm674 = vweird.f32 %v641
        %vm675 = vweird.f32 %v669
        %vm676 = vmor %vm674, %vm675
        %v677 = vsel %vm676, %v669, %v673
        %v678 = vand.u32 2147483647, %v641
        %vm679 = vcmp.eq.f32.partialorder %v678, 8.507059e+37
        %v680 = vand.u32 %v641, 2147483648
        %v681 = vor.u32 1.1754944e-38, %v680
        %v682 = vsel %vm679, %v681, %v677
        %v683 = vmul.f32 %v667, %v682
        %685 = vrot.lane.b32.xlu0 %v683, 16
        %v686 = vpop.permute.xlu0 %685
        %vm688 = vcmask 195712
        %689 = vst.msk [vmem:[#allocation4] sm:$0xff] %vm688, %v686
        %v690 = vld [vmem:[#allocation2] sm:$0xff]
        %v691 = vld [vmem:[#allocation3] sm:$0xff]
        %692 = vrot.lane.b32.xlu0 %v435, 104
        %v693 = vpop.permute.xlu0 %692
        %695 = vrot.lane.b32.xlu0 %v690, 104
        %v696 = vpop.permute.xlu0 %695
        %v697 = vsel %vm439, %v693, 0
        %v699 = vsel %vm439, %v696, 0
        %701 = vmatpush.xpose.msra.mxu0 0.0
        %702 = vmatpush.xpose.msra.mxu0 0.0
        %703 = vmatpush.xpose.msra.mxu0 0.0
        %704 = vmatpush.xpose.msra.mxu0 0.0
        %705 = vmatpush.xpose.msra.mxu0 0.0
        %706 = vmatpush.xpose.msra.mxu0 0.0
        %707 = vmatpush.xpose.msra.mxu0 0.0
        %708 = vmatpush.xpose.msra.mxu0 0.0
        %709 = vmatpush.xpose.msra.mxu0 0.0
        %710 = vmatpush.xpose.msra.mxu0 0.0
        %711 = vmatpush.xpose.msra.mxu0 0.0
        %712 = vmatpush.xpose.msra.mxu0 0.0
        %713 = vmatpush.xpose.msra.mxu0 0.0
        %714 = vmatpush.xpose.msra.mxu0 0.0
        %715 = vmatpush.xpose.msra.mxu0 0.0
        %716 = vmatpush.xpose.msra.mxu0 %v699
        %717 = vmatmul.f32.gmra.mxu0 %v697
        %v718 = vpop.f32.mrf.mxu0
        %v719 = vadd.f32 0.0, %v718
        %720 = vdwg.mxu0
        %v721 = vsel %vm439, %v719, -inf
        %722 = vmax.xlane.f32.xlu0 %v721
        %v723 = vpop.xlane.xlu0 %722
        %v724 = vsub.f32 %v719, %v723
        %v725 = vmul.f32 %v724, 1.442695
        %v726 = vpow.pop %v725
        %v727 = vsel %vm439, %v726, 0.0
        %728 = vadd.xlane.f32.xlu0 %v727
        %v729 = vpop.xlane.xlu0 %728
        %731 = vrot.lane.b32.xlu0 %v691, 104
        %v732 = vpop.permute.xlu0 %731
        %v735 = vsel %vm439, %v726, 0
        %737 = vmatpush.msra.mxu0 0.0
        %738 = vmatpush.msra.mxu0 0.0
        %739 = vmatpush.msra.mxu0 0.0
        %740 = vmatpush.msra.mxu0 0.0
        %741 = vmatpush.msra.mxu0 0.0
        %742 = vmatpush.msra.mxu0 0.0
        %743 = vmatpush.msra.mxu0 0.0
        %744 = vmatpush.msra.mxu0 0.0
        %745 = vmatpush.msra.mxu0 0.0
        %746 = vmatpush.msra.mxu0 0.0
        %747 = vmatpush.msra.mxu0 0.0
        %748 = vmatpush.msra.mxu0 0.0
        %749 = vmatpush.msra.mxu0 0.0
        %750 = vmatpush.msra.mxu0 0.0
        %751 = vmatpush.msra.mxu0 0.0
        %752 = vmatpush.msra.mxu0 %v732
        %753 = vmatmul.f32.gmra.mxu0 %v735
        %v754 = vpop.f32.mrf.mxu0
        %v755 = vadd.f32 0.0, %v754
        %756 = vdwg.mxu0
        %v757 = vrcp.pop %v729
        %v758 = vmul.f32 %v729, %v757
        %v759 = vsub.f32 1.0, %v758
        %v760 = vmul.f32 %v757, %v759
        %v761 = vadd.f32 %v757, %v760
        %vm762 = vweird.f32 %v729
        %vm763 = vweird.f32 %v757
        %vm764 = vmor %vm762, %vm763
        %v765 = vsel %vm764, %v757, %v761
        %v766 = vand.u32 2147483647, %v729
        %vm767 = vcmp.eq.f32.partialorder %v766, 8.507059e+37
        %v768 = vand.u32 %v729, 2147483648
        %v769 = vor.u32 1.1754944e-38, %v768
        %v770 = vsel %vm767, %v769, %v765
        %v771 = vmul.f32 %v755, %v770
        %773 = vrot.lane.b32.xlu0 %v771, 24
        %v774 = vpop.permute.xlu0 %773
        %vm776 = vcmask 261312
        %777 = vst.msk [vmem:[#allocation4] sm:$0xff] %vm776, %v774
        %v778 = vld [vmem:[#allocation4] sm:$0xff]
        %v779 = vld [vmem:[#allocation13] sm:$0xff]
        %v780 = vld [vmem:[#allocation13 + $0x8] sm:$0xff]
        %v781 = vld [vmem:[#allocation13 + $0x10] sm:$0xff]
        %v782 = vld [vmem:[#allocation13 + $0x18] sm:$0xff]
        %v783 = vld [vmem:[%s5] sm:$0x1]
        %v785 = vperm.slane %v783, 0
        %v788 = vsel %vm413, %v778, 0
        %790 = vmatpush.msra.mxu0 0.0
        %791 = vmatpush.msra.mxu0 0.0
        %792 = vmatpush.msra.mxu0 0.0
        %793 = vmatpush.msra.mxu0 0.0
        %794 = vmatpush.msra.mxu0 0.0
        %795 = vmatpush.msra.mxu0 0.0
        %796 = vmatpush.msra.mxu0 0.0
        %797 = vmatpush.msra.mxu0 0.0
        %798 = vmatpush.msra.mxu0 0.0
        %799 = vmatpush.msra.mxu0 0.0
        %800 = vmatpush.msra.mxu0 0.0
        %801 = vmatpush.msra.mxu0 0.0
        %802 = vmatpush.msra.mxu0 %v782
        %803 = vmatpush.msra.mxu0 %v781
        %804 = vmatpush.msra.mxu0 %v780
        %805 = vmatpush.msra.mxu0 %v779
        %806 = vmatmul.f32.gmra.mxu0 %v788
        %v807 = vpop.f32.mrf.mxu0
        %v808 = vadd.f32 %v785, %v807
        %809 = vdwg.mxu0
        %810 = vst.msk [vmem:[%s348] sm:$0xff] %vm413, %v808
        %s811 = sand.u32 %s178, 1
        %s812 = scalar_lea.sflag [#allocation7], %s811
        %s813 = sand.u32 %s178, 1
        %s814 = smul.addr %s813, 8
        %s815 = scalar_lea.vmem [#allocation14], %s814
        // Predicated region
        $region69: #{tpu_custom_call.1} parent=43 // pred_check
          %p816 = pneg %p188
        $region70: #{tpu_custom_call.1} parent=43 // pred_check_branch
          %818 = sbr.rel (%p816) target = $region72
        $region71: #{tpu_custom_call.1} parent=43 // pred_region
          %820 = vsyncadd %s812, 0
          %s821 = sadd.s32 %s30, %s29
          %s822 = smul.addr %s821, 8
          %s823 = scalar_lea.hbm %s6, %s822
          %s825 = sshll.u32 %s815, 4
          %s826 = int_to_ptr.vmem [resolvable:$true] %s825
          %s827 = sshll.u32 %s823, 4
          %s828 = int_to_ptr.hbm [resolvable:$true] %s827
          %830 = dma.vmem_to_hbm [thread:$0]  %s826, 128, %s828, %s812
        $region72: #{tpu_custom_call.1} parent=43 // pred_fallthru
          _
      $region44: #{tpu_custom_call.1} parent=5 // pred_fallthru
        _
      %p831 = scmp.le.s32.totalorder 2, %s20
      // Predicated region
      $region73: #{tpu_custom_call.1} parent=5 // pred_check
        %p832 = pneg %p831
      $region74: #{tpu_custom_call.1} parent=5 // pred_check_branch
        %834 = sbr.rel (%p832) target = $region76
      $region75: #{tpu_custom_call.1} parent=5 // pred_region
        %s835 = ssub.s32 %s20, 2
        // Predicated region
        $region77: #{tpu_custom_call.1} parent=75 // pred_check
          %p836 = pneg %p194
        $region78: #{tpu_custom_call.1} parent=75 // pred_check_branch
          %838 = sbr.rel (%p836) target = $region80
        $region79: #{tpu_custom_call.1} parent=75 // pred_region
          %s839 = sand.u32 %s179, 1
          %s840 = scalar_lea.sflag [#allocation7], %s839
          %s841 = sand.u32 %s179, 1
          %s842 = smul.addr %s841, 8
          %s843 = scalar_lea.vmem [#allocation14], %s842
          %845 = dma.done %s840, 128
        $region80: #{tpu_custom_call.1} parent=75 // pred_fallthru
          _
      $region76: #{tpu_custom_call.1} parent=5 // pred_fallthru
        _
    $region6: #{tpu_custom_call.1} parent=1 // loop_footer
      %s24 = sadd.s32 1, %s20
    $region7: #{tpu_custom_call.1} parent=1 // loop_footer_branch
      %19 = sbr.rel target = $region3
    $region8: #{tpu_custom_call.1} parent=1 // loop_exit
      _
    %846 = vsyncpa [#allocation6], 1
    %s847 = scalar_lea.sflag [#allocation6], 1
    %848 = vsyncpa %s847, 1
    %849 = vsyncpa [#allocation9], 1
    %850 = vsyncpa [#allocation12], 1
    %851 = vsyncpa [#allocation7], 1
    %s852 = scalar_lea.sflag [#allocation7], 1
    %853 = vsyncpa %s852, 1

</llo_original>
